<compile_context>
chip_gen: v5e
topology: v5e:2x2
jax: 0.10.0
libtpu: 0.0.40
codegen_flags: <defaults>
</compile_context>

<pallas_src>
import jax
import jax.numpy as jnp
from jax.experimental import pallas as pl
from jax.experimental.pallas import tpu as pltpu


def _pos_enc_kernel(x_ref, w_ref, b_ref, cls_ref, out_ref):
    # x_ref:   (B, S, F)     whole input resident in VMEM (no grid)
    # w_ref:   (F, H)
    # b_ref:   (1, H)
    # cls_ref: (1, 1, H)
    # out_ref: (B, S+1, H)
    x = x_ref[...]                                   # (B, S, F)
    B, S, F = x.shape
    H = w_ref.shape[1]

    # per-batch min/max over the sequence axis (torch dim=1, keepdim=True)
    x_min = jnp.min(x, axis=1, keepdims=True)        # (B, 1, F)
    x_max = jnp.max(x, axis=1, keepdims=True)        # (B, 1, F)

    # Exact reciprocal (only B*F elements -> cost indistinguishable from the
    # approx EUP path, but no accuracy loss) + cheap VPU multiplies.
    inv = pl.reciprocal(x_max - x_min + 1e-6, approx=False)
    x_norm = (x - x_min) * inv                       # (B, S, F)

    # Single fused MXU matmul over the collapsed (B*S, F) slab: (S, F) stays
    # the sublane/lane tile, so the leading-axis collapse is free. One push,
    # one pop, one bias add.
    proj = jnp.dot(x_norm.reshape(B * S, F), w_ref[...],
                   preferred_element_type=jnp.float32) + b_ref[...]
    proj = proj.reshape(B, S, H).astype(out_ref.dtype)

    # CLS token into row 0 of every batch, projection into rows 1..S.
    # Two stores total; the offset-1 masked store is far cheaper than the
    # extra XLA concatenate dispatch it replaces.
    out_ref[:, 0:1, :] = jnp.broadcast_to(cls_ref[...], (B, 1, H)).astype(out_ref.dtype)
    out_ref[:, 1:, :] = proj
    # TODO(synk): dropout is identity here (inference / eval mode); training-mode
    # dropout would need pltpu.prng_seed + pltpu.prng_random_bits masking.


def position_encoding_training(x, w, b, cls_token):
    """x: (B, S, F); w: (F, H); b: (H,); cls_token: (1, 1, H) -> (B, S+1, H)."""
    B, S, F = x.shape
    H = w.shape[1]
    b2 = b.reshape(1, H)

    flops = 2 * B * S * F * H + 6 * B * S * F
    bytes_accessed = 4 * (x.size + w.size + b2.size + cls_token.size + B * (S + 1) * H)

    return pl.pallas_call(
        _pos_enc_kernel,
        out_shape=jax.ShapeDtypeStruct((B, S + 1, H), jnp.float32),
        # No grid: whole problem (~KiB) is one invocation, whole arrays in VMEM.
        in_specs=[
            pl.BlockSpec(memory_space=pltpu.MemorySpace.VMEM),   # x
            pl.BlockSpec(memory_space=pltpu.MemorySpace.VMEM),   # w
            pl.BlockSpec(memory_space=pltpu.MemorySpace.VMEM),   # bias
            pl.BlockSpec(memory_space=pltpu.MemorySpace.VMEM),   # cls token
        ],
        out_specs=pl.BlockSpec(memory_space=pltpu.MemorySpace.VMEM),
        cost_estimate=pl.CostEstimate(
            flops=flops, transcendentals=B * F, bytes_accessed=bytes_accessed),
    )(x, w, b2, cls_token)


def reference(x, w, b, cls_token):
    x_min = jnp.min(x, axis=1, keepdims=True)
    x_max = jnp.max(x, axis=1, keepdims=True)
    xn = (x - x_min) / (x_max - x_min + 1e-6)
    proj = jnp.einsum("bsf,fh->bsh", xn, w,
                      precision=jax.lax.Precision.HIGHEST) + b
    cls = jnp.broadcast_to(cls_token, (x.shape[0], 1, w.shape[1]))
    return jnp.concatenate([cls, proj], axis=1)


if __name__ == "__main__":
    # Small shapes consistent with the module:
    #   batch=2, num_patches (seq)=8, fea_size=16, tf_hidden_dim=32
    B, S, F, H = 2, 8, 16, 32

    key = jax.random.PRNGKey(0)
    kx, kw, kb = jax.random.split(key, 3)

    x = jax.random.normal(kx, (B, S, F), dtype=jnp.float32)

    # Deterministic parameter init (synthetic, no checkpoint load):
    w = jax.random.normal(kw, (F, H), dtype=jnp.float32) * 0.02   # proj weight (F, H)
    b = jax.random.normal(kb, (H,), dtype=jnp.float32) * 0.02     # proj bias
    cls_token = jnp.ones((1, 1, H), dtype=jnp.float32)            # nn.Parameter(torch.ones(1,1,H))
    # position_embeddings = jnp.zeros((1, S + 1, H))  # declared in __init__ but unused in forward

    out = jax.block_until_ready(position_encoding_training(x, w, b, cls_token))

    ref = reference(x, w, b, cls_token)
    assert out.shape == (B, S + 1, H)
    assert jnp.allclose(out, ref, atol=1e-5, rtol=1e-5), "mismatch vs reference"

    print("KERNEL_OK")
</pallas_src>

<mosaic_0001>
module attributes {stable_mosaic.version = 11 : i64} {
  func.func @_pos_enc_kernel(%arg0: memref<2x8x16xf32, #tpu.memory_space<vmem>>, %arg1: memref<16x32xf32, #tpu.memory_space<vmem>>, %arg2: memref<1x32xf32, #tpu.memory_space<vmem>>, %arg3: memref<1x1x32xf32, #tpu.memory_space<vmem>>, %arg4: memref<2x9x32xf32, #tpu.memory_space<vmem>>) attributes {dimension_semantics = [], scalar_prefetch = 0 : i64, scratch_operands = 0 : i64, tpu.core_type = #tpu.core_type<tc>} {
    %c0 = arith.constant 0 : index
    %c0_0 = arith.constant 0 : index
    %c0_1 = arith.constant 0 : index
    %0 = vector.load %arg0[%c0, %c0_0, %c0_1] : memref<2x8x16xf32, #tpu.memory_space<vmem>>, vector<2x8x16xf32>
    %cst = arith.constant dense<0x7F800000> : vector<2x16xf32>
    %1 = vector.multi_reduction <minimumf>, %0, %cst [1] : vector<2x8x16xf32> to vector<2x16xf32>
    %2 = vector.shape_cast %1 : vector<2x16xf32> to vector<2x1x16xf32>
    %cst_2 = arith.constant dense<0xFF800000> : vector<2x16xf32>
    %3 = vector.multi_reduction <maximumf>, %0, %cst_2 [1] : vector<2x8x16xf32> to vector<2x16xf32>
    %4 = vector.shape_cast %3 : vector<2x16xf32> to vector<2x1x16xf32>
    %5 = arith.subf %4, %2 : vector<2x1x16xf32>
    %cst_3 = arith.constant 9.99999997E-7 : f32
    %6 = vector.broadcast %cst_3 : f32 to vector<2x1x16xf32>
    %7 = arith.addf %5, %6 : vector<2x1x16xf32>
    %8 = tpu.reciprocal %7 : vector<2x1x16xf32> -> vector<2x1x16xf32>
    %9 = vector.broadcast %2 : vector<2x1x16xf32> to vector<2x8x16xf32>
    %10 = arith.subf %0, %9 : vector<2x8x16xf32>
    %11 = vector.broadcast %8 : vector<2x1x16xf32> to vector<2x8x16xf32>
    %12 = arith.mulf %10, %11 : vector<2x8x16xf32>
    %13 = vector.shape_cast %12 : vector<2x8x16xf32> to vector<16x16xf32>
    %c0_4 = arith.constant 0 : index
    %c0_5 = arith.constant 0 : index
    %14 = vector.load %arg1[%c0_4, %c0_5] : memref<16x32xf32, #tpu.memory_space<vmem>>, vector<16x32xf32>
    %cst_6 = arith.constant dense<0.000000e+00> : vector<16x32xf32>
    %15 = tpu.matmul %13, %14, %cst_6 {dimension_numbers = #tpu.dot_dimension_numbers<[1], [0], [0], [1], [0, 0, 1, 1], [], []>} : vector<16x16xf32>, vector<16x32xf32>, vector<16x32xf32> -> vector<16x32xf32>
    %c0_7 = arith.constant 0 : index
    %c0_8 = arith.constant 0 : index
    %16 = vector.load %arg2[%c0_7, %c0_8] : memref<1x32xf32, #tpu.memory_space<vmem>>, vector<1x32xf32>
    %17 = vector.broadcast %16 : vector<1x32xf32> to vector<16x32xf32>
    %18 = arith.addf %15, %17 : vector<16x32xf32>
    %19 = vector.shape_cast %18 : vector<16x32xf32> to vector<2x8x32xf32>
    %c0_9 = arith.constant 0 : index
    %c0_10 = arith.constant 0 : index
    %c0_11 = arith.constant 0 : index
    %20 = vector.load %arg3[%c0_9, %c0_10, %c0_11] : memref<1x1x32xf32, #tpu.memory_space<vmem>>, vector<1x1x32xf32>
    %21 = vector.shape_cast %20 : vector<1x1x32xf32> to vector<1x1x32xf32>
    %22 = vector.broadcast %21 : vector<1x1x32xf32> to vector<2x1x32xf32>
    %c0_12 = arith.constant 0 : index
    %c0_13 = arith.constant 0 : index
    %c0_14 = arith.constant 0 : index
    %23 = vector.load %arg4[%c0_12, %c0_13, %c0_14] : memref<2x9x32xf32, #tpu.memory_space<vmem>>, vector<2x1x32xf32>
    tpu.vector_store %arg4[%c0_12, %c0_13, %c0_14], %22 {strides = array<i32>} : memref<2x9x32xf32, #tpu.memory_space<vmem>>, vector<2x1x32xf32>,
    %c0_15 = arith.constant 0 : index
    %c1 = arith.constant 1 : index
    %c0_16 = arith.constant 0 : index
    %24 = vector.load %arg4[%c0_15, %c1, %c0_16] : memref<2x9x32xf32, #tpu.memory_space<vmem>>, vector<2x8x32xf32>
    tpu.vector_store %arg4[%c0_15, %c1, %c0_16], %19 {strides = array<i32>} : memref<2x9x32xf32, #tpu.memory_space<vmem>>, vector<2x8x32xf32>,
    return
  }
}

</mosaic_0001>

<llo_original>
// kernel: tpu_custom_call.1
$region0: #{tpu_custom_call.1}
  #allocation0 [shape = 'u32[]', space=smem, size = 0x4, offset = 0x4, fixed_abs, tag = 'smem constant byte address 0x4 - core index']
  #allocation1 [shape = 'u32[72,128]{1,0:T(1,128)}', space=vmem, size = 0x9000, scoped, tag = 'internal scratch']
  %s0 = inlined_call_operand.hbm [shape: f32[2,8,16], index: 0, kind: input, shape index: {}]
  %s1 = inlined_call_operand.hbm [shape: f32[16,32], index: 1, kind: input, shape index: {}]
  %s2 = inlined_call_operand.vmem [shape: f32[1,32], index: 2, kind: input, shape index: {}]
  %s3 = inlined_call_operand.vmem [shape: f32[1,1,32], index: 3, kind: input, shape index: {}]
  %s4 = inlined_call_operand.vmem [shape: f32[2,9,32], index: 4, kind: output, shape index: {}]
  %s5 = sld [smem:[#allocation0]]
  $region34: #{tpu_custom_call.1} parent=0
    _
  %s7 = ssub.s32 1, %s5
  %s8 = scalar_select 0, %s7, %s5
  $region1: #{tpu_custom_call.1} parent=0
    #allocation2 [shape = 'u8[8192]{0}', space=vmem, size = 0x2000, scoped, tag = 'input window, operand 0, single buffered']
    #allocation3 [shape = 's32[1]{0}', space=sflag, size = 0x4, scoped, tag = 'scoped memory for tpu_custom_call.1']
    #allocation4 [shape = 'u8[8192]{0}', space=vmem, size = 0x2000, scoped, tag = 'input window, operand 1, single buffered']
    #allocation5 [shape = 's32[1]{0}', space=sflag, size = 0x4, scoped, tag = 'scoped memory for tpu_custom_call.1']
    %9 = vsyncpa [#allocation3], 0
    %10 = vsyncpa [#allocation5], 0
    // Predicated region
    $region2: #{tpu_custom_call.1} parent=1 // pred_check
      _
    $region3: #{tpu_custom_call.1} parent=1 // pred_check_branch
      %12 = sbr.rel (0) target = $region5
    $region4: #{tpu_custom_call.1} parent=1 // pred_region
      %14 = vsyncadd [#allocation3], 0
      %s15 = sshll.u32 %s0, 4
      %s16 = int_to_ptr.hbm [resolvable:$true] %s15
      %s17 = sshll.u32 [#allocation2], 4
      %s18 = int_to_ptr.vmem [resolvable:$true] %s17
      %23 = dma.hbm_to_vmem [thread:$0]  %s16, 256, %s18, [#allocation3], 128, 128, 8
    $region5: #{tpu_custom_call.1} parent=1 // pred_fallthru
      _
    // Predicated region
    $region6: #{tpu_custom_call.1} parent=1 // pred_check
      _
    $region7: #{tpu_custom_call.1} parent=1 // pred_check_branch
      %25 = sbr.rel (0) target = $region9
    $region8: #{tpu_custom_call.1} parent=1 // pred_region
      %27 = vsyncadd [#allocation5], 0
      %s28 = sshll.u32 %s1, 4
      %s29 = int_to_ptr.hbm [resolvable:$true] %s28
      %s30 = sshll.u32 [#allocation4], 4
      %s31 = int_to_ptr.vmem [resolvable:$true] %s30
      %36 = dma.hbm_to_vmem [thread:$0]  %s29, 256, %s31, [#allocation5], 128, 128, 8
    $region9: #{tpu_custom_call.1} parent=1 // pred_fallthru
      _
    // Predicated region
    $region10: #{tpu_custom_call.1} parent=1 // pred_check
      _
    $region11: #{tpu_custom_call.1} parent=1 // pred_check_branch
      %38 = sbr.rel (0) target = $region13
    $region12: #{tpu_custom_call.1} parent=1 // pred_region
      _
    $region13: #{tpu_custom_call.1} parent=1 // pred_fallthru
      _
    // Predicated region
    $region14: #{tpu_custom_call.1} parent=1 // pred_check
      _
    $region15: #{tpu_custom_call.1} parent=1 // pred_check_branch
      %40 = sbr.rel (0) target = $region17
    $region16: #{tpu_custom_call.1} parent=1 // pred_region
      _
    $region17: #{tpu_custom_call.1} parent=1 // pred_fallthru
      _
    // Predicated region
    $region18: #{tpu_custom_call.1} parent=1 // pred_check
      _
    $region19: #{tpu_custom_call.1} parent=1 // pred_check_branch
      %42 = sbr.rel (0) target = $region21
    $region20: #{tpu_custom_call.1} parent=1 // pred_region
      %44 = dma.done [#allocation3], 256
    $region21: #{tpu_custom_call.1} parent=1 // pred_fallthru
      _
    // Predicated region
    $region22: #{tpu_custom_call.1} parent=1 // pred_check
      _
    $region23: #{tpu_custom_call.1} parent=1 // pred_check_branch
      %46 = sbr.rel (0) target = $region25
    $region24: #{tpu_custom_call.1} parent=1 // pred_region
      %48 = dma.done [#allocation5], 256
    $region25: #{tpu_custom_call.1} parent=1 // pred_fallthru
      _
    %v49 = vld [vmem:[#allocation2] sm:$0xff]
    %v50 = vld [vmem:[#allocation2 + $0x8] sm:$0xff]
    %vm51 = vcmask 130048
    %v52 = vsel %vm51, %v49, inf
    %v53 = vrot.slane %v52, 4
    %v54 = vmin.f32 %v52, %v53
    %v55 = vrot.slane %v54, 2
    %v56 = vmin.f32 %v54, %v55
    %v57 = vrot.slane %v56, 1
    %v58 = vmin.f32 %v56, %v57
    %v59 = vsel %vm51, %v50, inf
    %v60 = vrot.slane %v59, 4
    %v61 = vmin.f32 %v59, %v60
    %v62 = vrot.slane %v61, 2
    %v63 = vmin.f32 %v61, %v62
    %v64 = vrot.slane %v63, 1
    %v65 = vmin.f32 %v63, %v64
    %v66 = vsel %vm51, %v49, -inf
    %v67 = vrot.slane %v66, 4
    %v68 = vmax.f32 %v66, %v67
    %v69 = vrot.slane %v68, 2
    %v70 = vmax.f32 %v68, %v69
    %v71 = vrot.slane %v70, 1
    %v72 = vmax.f32 %v70, %v71
    %v73 = vsel %vm51, %v50, -inf
    %v74 = vrot.slane %v73, 4
    %v75 = vmax.f32 %v73, %v74
    %v76 = vrot.slane %v75, 2
    %v77 = vmax.f32 %v75, %v76
    %v78 = vrot.slane %v77, 1
    %v79 = vmax.f32 %v77, %v78
    %v80 = vsub.f32 %v72, %v58
    %v81 = vsub.f32 %v79, %v65
    %v82 = vadd.f32 %v80, 1e-06
    %v83 = vadd.f32 %v81, 1e-06
    %v84 = vrcp.pop %v82
    %v85 = vmul.f32 %v82, %v84
    %v86 = vsub.f32 1.0, %v85
    %v87 = vmul.f32 %v84, %v86
    %v88 = vadd.f32 %v84, %v87
    %vm89 = vweird.f32 %v82
    %vm90 = vweird.f32 %v84
    %vm91 = vmor %vm89, %vm90
    %v92 = vsel %vm91, %v84, %v88
    %v93 = vand.u32 2147483647, %v82
    %vm94 = vcmp.eq.f32.partialorder %v93, 8.507059e+37
    %v95 = vand.u32 %v82, 2147483648
    %v96 = vor.u32 1.1754944e-38, %v95
    %v97 = vsel %vm94, %v96, %v92
    %v98 = vrcp.pop %v83
    %v99 = vmul.f32 %v83, %v98
    %v100 = vsub.f32 1.0, %v99
    %v101 = vmul.f32 %v98, %v100
    %v102 = vadd.f32 %v98, %v101
    %vm103 = vweird.f32 %v83
    %vm104 = vweird.f32 %v98
    %vm105 = vmor %vm103, %vm104
    %v106 = vsel %vm105, %v98, %v102
    %v107 = vand.u32 2147483647, %v83
    %vm108 = vcmp.eq.f32.partialorder %v107, 8.507059e+37
    %v109 = vand.u32 %v83, 2147483648
    %v110 = vor.u32 1.1754944e-38, %v109
    %v111 = vsel %vm108, %v110, %v106
    %v112 = vsub.f32 %v49, %v58
    %v113 = vsub.f32 %v50, %v65
    %v114 = vmul.f32 %v112, %v97
    %v115 = vmul.f32 %v113, %v111
    %v116 = vld [vmem:[#allocation4] sm:$0xff]
    %v117 = vld [vmem:[#allocation4 + $0x8] sm:$0xff]
    %v118 = vld [vmem:[%s2] sm:$0x1]
    %v120 = vperm.slane %v118, 0
    %v123 = vsel %vm51, %v114, 0
    %v126 = vsel %vm51, %v115, 0
    %128 = vmatpush.msra.mxu0 0.0
    %129 = vmatpush.msra.mxu0 0.0
    %130 = vmatpush.msra.mxu0 0.0
    %131 = vmatpush.msra.mxu0 0.0
    %132 = vmatpush.msra.mxu0 0.0
    %133 = vmatpush.msra.mxu0 0.0
    %134 = vmatpush.msra.mxu0 0.0
    %135 = vmatpush.msra.mxu0 0.0
    %136 = vmatpush.msra.mxu0 0.0
    %137 = vmatpush.msra.mxu0 0.0
    %138 = vmatpush.msra.mxu0 0.0
    %139 = vmatpush.msra.mxu0 0.0
    %140 = vmatpush.msra.mxu0 0.0
    %141 = vmatpush.msra.mxu0 0.0
    %142 = vmatpush.msra.mxu0 %v117
    %143 = vmatpush.msra.mxu0 %v116
    %144 = vmatmul.f32.gmra.mxu0 %v123
    %v145 = vpop.f32.mrf.mxu0
    %v146 = vadd.f32 %v120, %v145
    %147 = vmatmul.f32.gmra.mxu0 %v126
    %v148 = vpop.f32.mrf.mxu0
    %v149 = vadd.f32 %v120, %v148
    %150 = vdwg.mxu0
    %v151 = vld [vmem:[%s3] sm:$0x1]
    %vm152 = vcmask 253952
    %153 = vst.msk [vmem:[%s4] sm:$0x1] %vm152, %v151
    %154 = vst.msk [vmem:[%s4 + $0x10] sm:$0x1] %vm152, %v151
    %vm155 = vcmask 261120
    %156 = vst.msk [vmem:[%s4 + $0x1] sm:$0xff] %vm155, %v146
    %157 = vst.msk [vmem:[%s4 + $0x11] sm:$0xff] %vm155, %v149
    // Predicated region
    $region26: #{tpu_custom_call.1} parent=1 // pred_check
      _
    $region27: #{tpu_custom_call.1} parent=1 // pred_check_branch
      %159 = sbr.rel (0) target = $region29
    $region28: #{tpu_custom_call.1} parent=1 // pred_region
      _
    $region29: #{tpu_custom_call.1} parent=1 // pred_fallthru
      _
    // Predicated region
    $region30: #{tpu_custom_call.1} parent=1 // pred_check
      _
    $region31: #{tpu_custom_call.1} parent=1 // pred_check_branch
      %161 = sbr.rel (0) target = $region33
    $region32: #{tpu_custom_call.1} parent=1 // pred_region
      _
    $region33: #{tpu_custom_call.1} parent=1 // pred_fallthru
      _
    %162 = vsyncpa [#allocation3], 1
    %163 = vsyncpa [#allocation5], 1

</llo_original>
